<compile_context>
chip_gen: v6e
topology: v6e:2x2x1
jax: 0.10.0
libtpu: 0.0.40
codegen_flags: <defaults>
</compile_context>

<pallas_src>
import functools

import jax
import jax.numpy as jnp
from jax.experimental import pallas as pl
from jax.experimental.pallas import tpu as pltpu


def _fetch_rows(idx_sref, emb_hbm, buf, sem, base, R):
    """Gather R embedding rows (token ids idx[base:base+R]) HBM -> VMEM."""
    copies = []
    for r in range(R):
        tok = idx_sref[base + r]
        cp = pltpu.make_async_copy(emb_hbm.at[pl.ds(tok, 1)],   # (1, V) row
                                   buf.at[pl.ds(r, 1)],          # (1, V) slot
                                   sem.at[r])
        cp.start()
        copies.append(cp)
    for cp in copies:
        cp.wait()


def _bigram_loss_kernel(idx_sref, tgt_ref, emb_hbm, logits_ref, nll_ref,
                        buf, sem, *, R, V):
    # idx_sref : (N_pad,) int32 in SMEM (scalar prefetch, drives the gather)
    # tgt_ref  : (R, 1) int32 VMEM block of targets for this chunk
    # emb_hbm  : (V, V) embedding table left in HBM (pl.ANY)
    # logits_ref : (R, V) output block (emb dtype)
    # nll_ref  : (R, 128) per-row NLL output block (f32, lane-broadcast)
    # buf      : (R, V) VMEM gather buffer; sem: (R,) DMA semaphores
    c = pl.program_id(0)
    _fetch_rows(idx_sref, emb_hbm, buf, sem, c * R, R)

    rows_native = buf[...]                                        # (R, V)
    logits_ref[...] = rows_native
    rows = rows_native.astype(jnp.float32)

    t = tgt_ref[...]                                              # (R, 1)
    col = jax.lax.broadcasted_iota(jnp.int32, (R, V), 1)
    tgt_logit = jnp.sum(jnp.where(col == t, rows, 0.0),
                        axis=-1, keepdims=True)                   # (R, 1)
    m = jnp.max(rows, axis=-1, keepdims=True)                     # (R, 1)
    lse = m + jnp.log(jnp.sum(jnp.exp(rows - m), axis=-1, keepdims=True))
    nll = lse - tgt_logit                                         # (R, 1)
    nll_ref[...] = jnp.broadcast_to(nll, (R, 128))


def _bigram_logits_kernel(idx_sref, emb_hbm, logits_ref, buf, sem, *, R, V):
    c = pl.program_id(0)
    _fetch_rows(idx_sref, emb_hbm, buf, sem, c * R, R)
    logits_ref[...] = buf[...]


def _pick_chunk_rows(N, V, itemsize):
    # ~3 live (R, V) slabs (gather buffer + double-buffered logits block);
    # keep them comfortably inside the default scoped VMEM on every chip gen
    # (v7x has only 64 MiB physical / 32 MiB scoped).
    per_row = 3 * V * max(int(itemsize), 4)
    cap = (20 * 1024 * 1024) // per_row
    cap = max(8, min(128, (cap // 8) * 8))
    need = pl.cdiv(N, 8) * 8
    return min(cap, need)


def bigram_forward(idx, emb, targets=None):
    """Forward pass of BigramLanguageModel.

    idx:     (B, T) integer token ids
    emb:     (V, V) embedding table (nn.Embedding(vocab, vocab).weight)
    targets: optional (B, T) integer token ids

    Returns (logits, loss):
      targets given -> logits (B*T, V), loss scalar f32   (matches torch .view)
      targets None  -> logits (B, T, V), loss None
    """
    B, T = idx.shape
    V = emb.shape[0]
    N = B * T

    R = _pick_chunk_rows(N, V, jnp.dtype(emb.dtype).itemsize)
    Nc = pl.cdiv(N, R)
    N_pad = Nc * R

    idx_flat = idx.reshape(N).astype(jnp.int32)
    if N_pad != N:
        idx_flat = jnp.pad(idx_flat, (0, N_pad - N))   # pad with token 0 (valid row)

    cparams = pltpu.CompilerParams(dimension_semantics=("parallel",))

    if targets is not None:
        tgt_flat = targets.reshape(N).astype(jnp.int32)
        if N_pad != N:
            tgt_flat = jnp.pad(tgt_flat, (0, N_pad - N))
        tgt_col = tgt_flat.reshape(N_pad, 1)

        kernel = functools.partial(_bigram_loss_kernel, R=R, V=V)
        grid_spec = pltpu.PrefetchScalarGridSpec(
            num_scalar_prefetch=1,                     # idx -> SMEM
            grid=(Nc,),
            in_specs=[
                pl.BlockSpec((R, 1), lambda c, idx_s: (c, 0)),     # targets
                pl.BlockSpec(memory_space=pl.ANY),                 # emb stays in HBM
            ],
            out_specs=(
                pl.BlockSpec((R, V), lambda c, idx_s: (c, 0)),     # logits
                pl.BlockSpec((R, 128), lambda c, idx_s: (c, 0)),   # per-row NLL
            ),
            scratch_shapes=[
                pltpu.VMEM((R, V), emb.dtype),
                pltpu.SemaphoreType.DMA((R,)),
            ],
        )
        logits_p, nll_p = pl.pallas_call(
            kernel,
            grid_spec=grid_spec,
            out_shape=(
                jax.ShapeDtypeStruct((N_pad, V), emb.dtype),
                jax.ShapeDtypeStruct((N_pad, 128), jnp.float32),
            ),
            compiler_params=cparams,
        )(idx_flat, tgt_col, emb)

        logits = logits_p if N_pad == N else logits_p[:N]
        loss = jnp.mean(nll_p[:N, 0])
        return logits, loss

    # Inference path: logits only, no dummy targets / loss block.
    kernel = functools.partial(_bigram_logits_kernel, R=R, V=V)
    grid_spec = pltpu.PrefetchScalarGridSpec(
        num_scalar_prefetch=1,
        grid=(Nc,),
        in_specs=[pl.BlockSpec(memory_space=pl.ANY)],
        out_specs=pl.BlockSpec((R, V), lambda c, idx_s: (c, 0)),
        scratch_shapes=[
            pltpu.VMEM((R, V), emb.dtype),
            pltpu.SemaphoreType.DMA((R,)),
        ],
    )
    logits_p = pl.pallas_call(
        kernel,
        grid_spec=grid_spec,
        out_shape=jax.ShapeDtypeStruct((N_pad, V), emb.dtype),
        compiler_params=cparams,
    )(idx_flat, emb)
    logits = logits_p if N_pad == N else logits_p[:N]
    return logits.reshape(B, T, V), None


if __name__ == "__main__":
    # Small deterministic setup: vocab=128, batch=2, seq=8
    vocab_size = 128
    B, T = 2, 8
    N = B * T

    key = jax.random.PRNGKey(0)
    k_emb, k_idx, k_tgt = jax.random.split(key, 3)

    # nn.Embedding default init: N(0, 1)
    emb = jax.random.normal(k_emb, (vocab_size, vocab_size), dtype=jnp.float32)
    idx = jax.random.randint(k_idx, (B, T), 0, vocab_size, dtype=jnp.int32)
    targets = jax.random.randint(k_tgt, (B, T), 0, vocab_size, dtype=jnp.int32)

    # Training path (targets given): logits (B*T, V) + mean cross-entropy loss.
    logits, loss = bigram_forward(idx, emb, targets)
    jax.block_until_ready((logits, loss))

    # Inference path (no targets): logits (B, T, V), loss None.
    logits_inf, loss_inf = bigram_forward(idx, emb)
    jax.block_until_ready(logits_inf)

    # Pure-JAX reference.
    ref_logits = emb[idx]                                         # (B, T, V)
    lg = ref_logits.reshape(N, vocab_size)
    lse = jax.nn.logsumexp(lg, axis=-1)
    ref_loss = jnp.mean(lse - lg[jnp.arange(N), targets.reshape(-1)])

    assert logits.shape == (N, vocab_size)
    assert jnp.allclose(logits, lg, atol=1e-5)
    assert jnp.allclose(loss, ref_loss, atol=1e-5)
    assert logits_inf.shape == (B, T, vocab_size)
    assert jnp.allclose(logits_inf, ref_logits, atol=1e-5)
    assert loss_inf is None

    print("KERNEL_OK")
</pallas_src>

<mosaic_0001>
module attributes {stable_mosaic.version = 11 : i64} {
  func.func @_bigram_loss_kernel(%arg0: i32, %arg1: memref<16xi32, #tpu.memory_space<smem>>, %arg2: memref<16x1xi32, #tpu.memory_space<vmem>>, %arg3: memref<128x128xf32, #tpu.memory_space<any>>, %arg4: memref<16x128xf32, #tpu.memory_space<vmem>>, %arg5: memref<16x128xf32, #tpu.memory_space<vmem>>, %arg6: memref<16x128xf32, #tpu.memory_space<vmem>>, %arg7: memref<16x!tpu.dma_semaphore, #tpu.memory_space<semaphore_mem>>) attributes {dimension_semantics = [#tpu.dimension_semantics<parallel>], iteration_bounds = array<i64: 1>, scalar_prefetch = 1 : i64, scratch_operands = 2 : i64, tpu.core_type = #tpu.core_type<tc>, window_params = [{transform_indices = @transform_0, window_bounds = array<i64: 16, 1>}, {}, {transform_indices = @transform_2, window_bounds = array<i64: 16, 128>}, {transform_indices = @transform_3, window_bounds = array<i64: 16, 128>}]} {
    %c16_i32 = arith.constant 16 : i32
    %0 = arith.muli %arg0, %c16_i32 : i32
    %c0_i32 = arith.constant 0 : i32
    %1 = arith.addi %0, %c0_i32 : i32
    %2 = arith.index_cast %1 : i32 to index
    %3 = memref.load %arg1[%2] : memref<16xi32, #tpu.memory_space<smem>>
    %c0_i32_0 = arith.constant 0 : i32
    %c0_i32_1 = arith.constant 0 : i32
    %4 = tpu.memref_slice %arg3[%3, %c0_i32_1] : memref<128x128xf32, #tpu.memory_space<any>> -> memref<1x128xf32, #tpu.memory_space<any>>
    %c0_i32_2 = arith.constant 0 : i32
    %c0_i32_3 = arith.constant 0 : i32
    %5 = tpu.memref_slice %arg6[%c0_i32_2, %c0_i32_3] : memref<16x128xf32, #tpu.memory_space<vmem>> -> memref<1x128xf32, #tpu.memory_space<vmem>>
    %6 = tpu.memref_slice %arg7[%c0_i32_0] : memref<16x!tpu.dma_semaphore, #tpu.memory_space<semaphore_mem>> -> memref<1x!tpu.dma_semaphore, #tpu.memory_space<semaphore_mem>>
    %7 = tpu.memref_squeeze %6 : memref<1x!tpu.dma_semaphore, #tpu.memory_space<semaphore_mem>> -> memref<!tpu.dma_semaphore, #tpu.memory_space<semaphore_mem>>
    tpu.enqueue_dma source(%4 : memref<1x128xf32, #tpu.memory_space<any>>) target(%5 : memref<1x128xf32, #tpu.memory_space<vmem>>) target_semaphore(%7 : memref<!tpu.dma_semaphore, #tpu.memory_space<semaphore_mem>>)
    %c1_i32 = arith.constant 1 : i32
    %8 = arith.addi %0, %c1_i32 : i32
    %9 = arith.index_cast %8 : i32 to index
    %10 = memref.load %arg1[%9] : memref<16xi32, #tpu.memory_space<smem>>
    %c1_i32_4 = arith.constant 1 : i32
    %c0_i32_5 = arith.constant 0 : i32
    %11 = tpu.memref_slice %arg3[%10, %c0_i32_5] : memref<128x128xf32, #tpu.memory_space<any>> -> memref<1x128xf32, #tpu.memory_space<any>>
    %c1_i32_6 = arith.constant 1 : i32
    %c0_i32_7 = arith.constant 0 : i32
    %12 = tpu.memref_slice %arg6[%c1_i32_6, %c0_i32_7] : memref<16x128xf32, #tpu.memory_space<vmem>> -> memref<1x128xf32, #tpu.memory_space<vmem>>
    %13 = tpu.memref_slice %arg7[%c1_i32_4] : memref<16x!tpu.dma_semaphore, #tpu.memory_space<semaphore_mem>> -> memref<1x!tpu.dma_semaphore, #tpu.memory_space<semaphore_mem>>
    %14 = tpu.memref_squeeze %13 : memref<1x!tpu.dma_semaphore, #tpu.memory_space<semaphore_mem>> -> memref<!tpu.dma_semaphore, #tpu.memory_space<semaphore_mem>>
    tpu.enqueue_dma source(%11 : memref<1x128xf32, #tpu.memory_space<any>>) target(%12 : memref<1x128xf32, #tpu.memory_space<vmem>>) target_semaphore(%14 : memref<!tpu.dma_semaphore, #tpu.memory_space<semaphore_mem>>)
    %c2_i32 = arith.constant 2 : i32
    %15 = arith.addi %0, %c2_i32 : i32
    %16 = arith.index_cast %15 : i32 to index
    %17 = memref.load %arg1[%16] : memref<16xi32, #tpu.memory_space<smem>>
    %c2_i32_8 = arith.constant 2 : i32
    %c0_i32_9 = arith.constant 0 : i32
    %18 = tpu.memref_slice %arg3[%17, %c0_i32_9] : memref<128x128xf32, #tpu.memory_space<any>> -> memref<1x128xf32, #tpu.memory_space<any>>
    %c2_i32_10 = arith.constant 2 : i32
    %c0_i32_11 = arith.constant 0 : i32
    %19 = tpu.memref_slice %arg6[%c2_i32_10, %c0_i32_11] : memref<16x128xf32, #tpu.memory_space<vmem>> -> memref<1x128xf32, #tpu.memory_space<vmem>>
    %20 = tpu.memref_slice %arg7[%c2_i32_8] : memref<16x!tpu.dma_semaphore, #tpu.memory_space<semaphore_mem>> -> memref<1x!tpu.dma_semaphore, #tpu.memory_space<semaphore_mem>>
    %21 = tpu.memref_squeeze %20 : memref<1x!tpu.dma_semaphore, #tpu.memory_space<semaphore_mem>> -> memref<!tpu.dma_semaphore, #tpu.memory_space<semaphore_mem>>
    tpu.enqueue_dma source(%18 : memref<1x128xf32, #tpu.memory_space<any>>) target(%19 : memref<1x128xf32, #tpu.memory_space<vmem>>) target_semaphore(%21 : memref<!tpu.dma_semaphore, #tpu.memory_space<semaphore_mem>>)
    %c3_i32 = arith.constant 3 : i32
    %22 = arith.addi %0, %c3_i32 : i32
    %23 = arith.index_cast %22 : i32 to index
    %24 = memref.load %arg1[%23] : memref<16xi32, #tpu.memory_space<smem>>
    %c3_i32_12 = arith.constant 3 : i32
    %c0_i32_13 = arith.constant 0 : i32
    %25 = tpu.memref_slice %arg3[%24, %c0_i32_13] : memref<128x128xf32, #tpu.memory_space<any>> -> memref<1x128xf32, #tpu.memory_space<any>>
    %c3_i32_14 = arith.constant 3 : i32
    %c0_i32_15 = arith.constant 0 : i32
    %26 = tpu.memref_slice %arg6[%c3_i32_14, %c0_i32_15] : memref<16x128xf32, #tpu.memory_space<vmem>> -> memref<1x128xf32, #tpu.memory_space<vmem>>
    %27 = tpu.memref_slice %arg7[%c3_i32_12] : memref<16x!tpu.dma_semaphore, #tpu.memory_space<semaphore_mem>> -> memref<1x!tpu.dma_semaphore, #tpu.memory_space<semaphore_mem>>
    %28 = tpu.memref_squeeze %27 : memref<1x!tpu.dma_semaphore, #tpu.memory_space<semaphore_mem>> -> memref<!tpu.dma_semaphore, #tpu.memory_space<semaphore_mem>>
    tpu.enqueue_dma source(%25 : memref<1x128xf32, #tpu.memory_space<any>>) target(%26 : memref<1x128xf32, #tpu.memory_space<vmem>>) target_semaphore(%28 : memref<!tpu.dma_semaphore, #tpu.memory_space<semaphore_mem>>)
    %c4_i32 = arith.constant 4 : i32
    %29 = arith.addi %0, %c4_i32 : i32
    %30 = arith.index_cast %29 : i32 to index
    %31 = memref.load %arg1[%30] : memref<16xi32, #tpu.memory_space<smem>>
    %c4_i32_16 = arith.constant 4 : i32
    %c0_i32_17 = arith.constant 0 : i32
    %32 = tpu.memref_slice %arg3[%31, %c0_i32_17] : memref<128x128xf32, #tpu.memory_space<any>> -> memref<1x128xf32, #tpu.memory_space<any>>
    %c4_i32_18 = arith.constant 4 : i32
    %c0_i32_19 = arith.constant 0 : i32
    %33 = tpu.memref_slice %arg6[%c4_i32_18, %c0_i32_19] : memref<16x128xf32, #tpu.memory_space<vmem>> -> memref<1x128xf32, #tpu.memory_space<vmem>>
    %34 = tpu.memref_slice %arg7[%c4_i32_16] : memref<16x!tpu.dma_semaphore, #tpu.memory_space<semaphore_mem>> -> memref<1x!tpu.dma_semaphore, #tpu.memory_space<semaphore_mem>>
    %35 = tpu.memref_squeeze %34 : memref<1x!tpu.dma_semaphore, #tpu.memory_space<semaphore_mem>> -> memref<!tpu.dma_semaphore, #tpu.memory_space<semaphore_mem>>
    tpu.enqueue_dma source(%32 : memref<1x128xf32, #tpu.memory_space<any>>) target(%33 : memref<1x128xf32, #tpu.memory_space<vmem>>) target_semaphore(%35 : memref<!tpu.dma_semaphore, #tpu.memory_space<semaphore_mem>>)
    %c5_i32 = arith.constant 5 : i32
    %36 = arith.addi %0, %c5_i32 : i32
    %37 = arith.index_cast %36 : i32 to index
    %38 = memref.load %arg1[%37] : memref<16xi32, #tpu.memory_space<smem>>
    %c5_i32_20 = arith.constant 5 : i32
    %c0_i32_21 = arith.constant 0 : i32
    %39 = tpu.memref_slice %arg3[%38, %c0_i32_21] : memref<128x128xf32, #tpu.memory_space<any>> -> memref<1x128xf32, #tpu.memory_space<any>>
    %c5_i32_22 = arith.constant 5 : i32
    %c0_i32_23 = arith.constant 0 : i32
    %40 = tpu.memref_slice %arg6[%c5_i32_22, %c0_i32_23] : memref<16x128xf32, #tpu.memory_space<vmem>> -> memref<1x128xf32, #tpu.memory_space<vmem>>
    %41 = tpu.memref_slice %arg7[%c5_i32_20] : memref<16x!tpu.dma_semaphore, #tpu.memory_space<semaphore_mem>> -> memref<1x!tpu.dma_semaphore, #tpu.memory_space<semaphore_mem>>
    %42 = tpu.memref_squeeze %41 : memref<1x!tpu.dma_semaphore, #tpu.memory_space<semaphore_mem>> -> memref<!tpu.dma_semaphore, #tpu.memory_space<semaphore_mem>>
    tpu.enqueue_dma source(%39 : memref<1x128xf32, #tpu.memory_space<any>>) target(%40 : memref<1x128xf32, #tpu.memory_space<vmem>>) target_semaphore(%42 : memref<!tpu.dma_semaphore, #tpu.memory_space<semaphore_mem>>)
    %c6_i32 = arith.constant 6 : i32
    %43 = arith.addi %0, %c6_i32 : i32
    %44 = arith.index_cast %43 : i32 to index
    %45 = memref.load %arg1[%44] : memref<16xi32, #tpu.memory_space<smem>>
    %c6_i32_24 = arith.constant 6 : i32
    %c0_i32_25 = arith.constant 0 : i32
    %46 = tpu.memref_slice %arg3[%45, %c0_i32_25] : memref<128x128xf32, #tpu.memory_space<any>> -> memref<1x128xf32, #tpu.memory_space<any>>
    %c6_i32_26 = arith.constant 6 : i32
    %c0_i32_27 = arith.constant 0 : i32
    %47 = tpu.memref_slice %arg6[%c6_i32_26, %c0_i32_27] : memref<16x128xf32, #tpu.memory_space<vmem>> -> memref<1x128xf32, #tpu.memory_space<vmem>>
    %48 = tpu.memref_slice %arg7[%c6_i32_24] : memref<16x!tpu.dma_semaphore, #tpu.memory_space<semaphore_mem>> -> memref<1x!tpu.dma_semaphore, #tpu.memory_space<semaphore_mem>>
    %49 = tpu.memref_squeeze %48 : memref<1x!tpu.dma_semaphore, #tpu.memory_space<semaphore_mem>> -> memref<!tpu.dma_semaphore, #tpu.memory_space<semaphore_mem>>
    tpu.enqueue_dma source(%46 : memref<1x128xf32, #tpu.memory_space<any>>) target(%47 : memref<1x128xf32, #tpu.memory_space<vmem>>) target_semaphore(%49 : memref<!tpu.dma_semaphore, #tpu.memory_space<semaphore_mem>>)
    %c7_i32 = arith.constant 7 : i32
    %50 = arith.addi %0, %c7_i32 : i32
    %51 = arith.index_cast %50 : i32 to index
    %52 = memref.load %arg1[%51] : memref<16xi32, #tpu.memory_space<smem>>
    %c7_i32_28 = arith.constant 7 : i32
    %c0_i32_29 = arith.constant 0 : i32
    %53 = tpu.memref_slice %arg3[%52, %c0_i32_29] : memref<128x128xf32, #tpu.memory_space<any>> -> memref<1x128xf32, #tpu.memory_space<any>>
    %c7_i32_30 = arith.constant 7 : i32
    %c0_i32_31 = arith.constant 0 : i32
    %54 = tpu.memref_slice %arg6[%c7_i32_30, %c0_i32_31] : memref<16x128xf32, #tpu.memory_space<vmem>> -> memref<1x128xf32, #tpu.memory_space<vmem>>
    %55 = tpu.memref_slice %arg7[%c7_i32_28] : memref<16x!tpu.dma_semaphore, #tpu.memory_space<semaphore_mem>> -> memref<1x!tpu.dma_semaphore, #tpu.memory_space<semaphore_mem>>
    %56 = tpu.memref_squeeze %55 : memref<1x!tpu.dma_semaphore, #tpu.memory_space<semaphore_mem>> -> memref<!tpu.dma_semaphore, #tpu.memory_space<semaphore_mem>>
    tpu.enqueue_dma source(%53 : memref<1x128xf32, #tpu.memory_space<any>>) target(%54 : memref<1x128xf32, #tpu.memory_space<vmem>>) target_semaphore(%56 : memref<!tpu.dma_semaphore, #tpu.memory_space<semaphore_mem>>)
    %c8_i32 = arith.constant 8 : i32
    %57 = arith.addi %0, %c8_i32 : i32
    %58 = arith.index_cast %57 : i32 to index
    %59 = memref.load %arg1[%58] : memref<16xi32, #tpu.memory_space<smem>>
    %c8_i32_32 = arith.constant 8 : i32
    %c0_i32_33 = arith.constant 0 : i32
    %60 = tpu.memref_slice %arg3[%59, %c0_i32_33] : memref<128x128xf32, #tpu.memory_space<any>> -> memref<1x128xf32, #tpu.memory_space<any>>
    %c8_i32_34 = arith.constant 8 : i32
    %c0_i32_35 = arith.constant 0 : i32
    %61 = tpu.memref_slice %arg6[%c8_i32_34, %c0_i32_35] : memref<16x128xf32, #tpu.memory_space<vmem>> -> memref<1x128xf32, #tpu.memory_space<vmem>>
    %62 = tpu.memref_slice %arg7[%c8_i32_32] : memref<16x!tpu.dma_semaphore, #tpu.memory_space<semaphore_mem>> -> memref<1x!tpu.dma_semaphore, #tpu.memory_space<semaphore_mem>>
    %63 = tpu.memref_squeeze %62 : memref<1x!tpu.dma_semaphore, #tpu.memory_space<semaphore_mem>> -> memref<!tpu.dma_semaphore, #tpu.memory_space<semaphore_mem>>
    tpu.enqueue_dma source(%60 : memref<1x128xf32, #tpu.memory_space<any>>) target(%61 : memref<1x128xf32, #tpu.memory_space<vmem>>) target_semaphore(%63 : memref<!tpu.dma_semaphore, #tpu.memory_space<semaphore_mem>>)
    %c9_i32 = arith.constant 9 : i32
    %64 = arith.addi %0, %c9_i32 : i32
    %65 = arith.index_cast %64 : i32 to index
    %66 = memref.load %arg1[%65] : memref<16xi32, #tpu.memory_space<smem>>
    %c9_i32_36 = arith.constant 9 : i32
    %c0_i32_37 = arith.constant 0 : i32
    %67 = tpu.memref_slice %arg3[%66, %c0_i32_37] : memref<128x128xf32, #tpu.memory_space<any>> -> memref<1x128xf32, #tpu.memory_space<any>>
    %c9_i32_38 = arith.constant 9 : i32
    %c0_i32_39 = arith.constant 0 : i32
    %68 = tpu.memref_slice %arg6[%c9_i32_38, %c0_i32_39] : memref<16x128xf32, #tpu.memory_space<vmem>> -> memref<1x128xf32, #tpu.memory_space<vmem>>
    %69 = tpu.memref_slice %arg7[%c9_i32_36] : memref<16x!tpu.dma_semaphore, #tpu.memory_space<semaphore_mem>> -> memref<1x!tpu.dma_semaphore, #tpu.memory_space<semaphore_mem>>
    %70 = tpu.memref_squeeze %69 : memref<1x!tpu.dma_semaphore, #tpu.memory_space<semaphore_mem>> -> memref<!tpu.dma_semaphore, #tpu.memory_space<semaphore_mem>>
    tpu.enqueue_dma source(%67 : memref<1x128xf32, #tpu.memory_space<any>>) target(%68 : memref<1x128xf32, #tpu.memory_space<vmem>>) target_semaphore(%70 : memref<!tpu.dma_semaphore, #tpu.memory_space<semaphore_mem>>)
    %c10_i32 = arith.constant 10 : i32
    %71 = arith.addi %0, %c10_i32 : i32
    %72 = arith.index_cast %71 : i32 to index
    %73 = memref.load %arg1[%72] : memref<16xi32, #tpu.memory_space<smem>>
    %c10_i32_40 = arith.constant 10 : i32
    %c0_i32_41 = arith.constant 0 : i32
    %74 = tpu.memref_slice %arg3[%73, %c0_i32_41] : memref<128x128xf32, #tpu.memory_space<any>> -> memref<1x128xf32, #tpu.memory_space<any>>
    %c10_i32_42 = arith.constant 10 : i32
    %c0_i32_43 = arith.constant 0 : i32
    %75 = tpu.memref_slice %arg6[%c10_i32_42, %c0_i32_43] : memref<16x128xf32, #tpu.memory_space<vmem>> -> memref<1x128xf32, #tpu.memory_space<vmem>>
    %76 = tpu.memref_slice %arg7[%c10_i32_40] : memref<16x!tpu.dma_semaphore, #tpu.memory_space<semaphore_mem>> -> memref<1x!tpu.dma_semaphore, #tpu.memory_space<semaphore_mem>>
    %77 = tpu.memref_squeeze %76 : memref<1x!tpu.dma_semaphore, #tpu.memory_space<semaphore_mem>> -> memref<!tpu.dma_semaphore, #tpu.memory_space<semaphore_mem>>
    tpu.enqueue_dma source(%74 : memref<1x128xf32, #tpu.memory_space<any>>) target(%75 : memref<1x128xf32, #tpu.memory_space<vmem>>) target_semaphore(%77 : memref<!tpu.dma_semaphore, #tpu.memory_space<semaphore_mem>>)
    %c11_i32 = arith.constant 11 : i32
    %78 = arith.addi %0, %c11_i32 : i32
    %79 = arith.index_cast %78 : i32 to index
    %80 = memref.load %arg1[%79] : memref<16xi32, #tpu.memory_space<smem>>
    %c11_i32_44 = arith.constant 11 : i32
    %c0_i32_45 = arith.constant 0 : i32
    %81 = tpu.memref_slice %arg3[%80, %c0_i32_45] : memref<128x128xf32, #tpu.memory_space<any>> -> memref<1x128xf32, #tpu.memory_space<any>>
    %c11_i32_46 = arith.constant 11 : i32
    %c0_i32_47 = arith.constant 0 : i32
    %82 = tpu.memref_slice %arg6[%c11_i32_46, %c0_i32_47] : memref<16x128xf32, #tpu.memory_space<vmem>> -> memref<1x128xf32, #tpu.memory_space<vmem>>
    %83 = tpu.memref_slice %arg7[%c11_i32_44] : memref<16x!tpu.dma_semaphore, #tpu.memory_space<semaphore_mem>> -> memref<1x!tpu.dma_semaphore, #tpu.memory_space<semaphore_mem>>
    %84 = tpu.memref_squeeze %83 : memref<1x!tpu.dma_semaphore, #tpu.memory_space<semaphore_mem>> -> memref<!tpu.dma_semaphore, #tpu.memory_space<semaphore_mem>>
    tpu.enqueue_dma source(%81 : memref<1x128xf32, #tpu.memory_space<any>>) target(%82 : memref<1x128xf32, #tpu.memory_space<vmem>>) target_semaphore(%84 : memref<!tpu.dma_semaphore, #tpu.memory_space<semaphore_mem>>)
    %c12_i32 = arith.constant 12 : i32
    %85 = arith.addi %0, %c12_i32 : i32
    %86 = arith.index_cast %85 : i32 to index
    %87 = memref.load %arg1[%86] : memref<16xi32, #tpu.memory_space<smem>>
    %c12_i32_48 = arith.constant 12 : i32
    %c0_i32_49 = arith.constant 0 : i32
    %88 = tpu.memref_slice %arg3[%87, %c0_i32_49] : memref<128x128xf32, #tpu.memory_space<any>> -> memref<1x128xf32, #tpu.memory_space<any>>
    %c12_i32_50 = arith.constant 12 : i32
    %c0_i32_51 = arith.constant 0 : i32
    %89 = tpu.memref_slice %arg6[%c12_i32_50, %c0_i32_51] : memref<16x128xf32, #tpu.memory_space<vmem>> -> memref<1x128xf32, #tpu.memory_space<vmem>>
    %90 = tpu.memref_slice %arg7[%c12_i32_48] : memref<16x!tpu.dma_semaphore, #tpu.memory_space<semaphore_mem>> -> memref<1x!tpu.dma_semaphore, #tpu.memory_space<semaphore_mem>>
    %91 = tpu.memref_squeeze %90 : memref<1x!tpu.dma_semaphore, #tpu.memory_space<semaphore_mem>> -> memref<!tpu.dma_semaphore, #tpu.memory_space<semaphore_mem>>
    tpu.enqueue_dma source(%88 : memref<1x128xf32, #tpu.memory_space<any>>) target(%89 : memref<1x128xf32, #tpu.memory_space<vmem>>) target_semaphore(%91 : memref<!tpu.dma_semaphore, #tpu.memory_space<semaphore_mem>>)
    %c13_i32 = arith.constant 13 : i32
    %92 = arith.addi %0, %c13_i32 : i32
    %93 = arith.index_cast %92 : i32 to index
    %94 = memref.load %arg1[%93] : memref<16xi32, #tpu.memory_space<smem>>
    %c13_i32_52 = arith.constant 13 : i32
    %c0_i32_53 = arith.constant 0 : i32
    %95 = tpu.memref_slice %arg3[%94, %c0_i32_53] : memref<128x128xf32, #tpu.memory_space<any>> -> memref<1x128xf32, #tpu.memory_space<any>>
    %c13_i32_54 = arith.constant 13 : i32
    %c0_i32_55 = arith.constant 0 : i32
    %96 = tpu.memref_slice %arg6[%c13_i32_54, %c0_i32_55] : memref<16x128xf32, #tpu.memory_space<vmem>> -> memref<1x128xf32, #tpu.memory_space<vmem>>
    %97 = tpu.memref_slice %arg7[%c13_i32_52] : memref<16x!tpu.dma_semaphore, #tpu.memory_space<semaphore_mem>> -> memref<1x!tpu.dma_semaphore, #tpu.memory_space<semaphore_mem>>
    %98 = tpu.memref_squeeze %97 : memref<1x!tpu.dma_semaphore, #tpu.memory_space<semaphore_mem>> -> memref<!tpu.dma_semaphore, #tpu.memory_space<semaphore_mem>>
    tpu.enqueue_dma source(%95 : memref<1x128xf32, #tpu.memory_space<any>>) target(%96 : memref<1x128xf32, #tpu.memory_space<vmem>>) target_semaphore(%98 : memref<!tpu.dma_semaphore, #tpu.memory_space<semaphore_mem>>)
    %c14_i32 = arith.constant 14 : i32
    %99 = arith.addi %0, %c14_i32 : i32
    %100 = arith.index_cast %99 : i32 to index
    %101 = memref.load %arg1[%100] : memref<16xi32, #tpu.memory_space<smem>>
    %c14_i32_56 = arith.constant 14 : i32
    %c0_i32_57 = arith.constant 0 : i32
    %102 = tpu.memref_slice %arg3[%101, %c0_i32_57] : memref<128x128xf32, #tpu.memory_space<any>> -> memref<1x128xf32, #tpu.memory_space<any>>
    %c14_i32_58 = arith.constant 14 : i32
    %c0_i32_59 = arith.constant 0 : i32
    %103 = tpu.memref_slice %arg6[%c14_i32_58, %c0_i32_59] : memref<16x128xf32, #tpu.memory_space<vmem>> -> memref<1x128xf32, #tpu.memory_space<vmem>>
    %104 = tpu.memref_slice %arg7[%c14_i32_56] : memref<16x!tpu.dma_semaphore, #tpu.memory_space<semaphore_mem>> -> memref<1x!tpu.dma_semaphore, #tpu.memory_space<semaphore_mem>>
    %105 = tpu.memref_squeeze %104 : memref<1x!tpu.dma_semaphore, #tpu.memory_space<semaphore_mem>> -> memref<!tpu.dma_semaphore, #tpu.memory_space<semaphore_mem>>
    tpu.enqueue_dma source(%102 : memref<1x128xf32, #tpu.memory_space<any>>) target(%103 : memref<1x128xf32, #tpu.memory_space<vmem>>) target_semaphore(%105 : memref<!tpu.dma_semaphore, #tpu.memory_space<semaphore_mem>>)
    %c15_i32 = arith.constant 15 : i32
    %106 = arith.addi %0, %c15_i32 : i32
    %107 = arith.index_cast %106 : i32 to index
    %108 = memref.load %arg1[%107] : memref<16xi32, #tpu.memory_space<smem>>
    %c15_i32_60 = arith.constant 15 : i32
    %c0_i32_61 = arith.constant 0 : i32
    %109 = tpu.memref_slice %arg3[%108, %c0_i32_61] : memref<128x128xf32, #tpu.memory_space<any>> -> memref<1x128xf32, #tpu.memory_space<any>>
    %c15_i32_62 = arith.constant 15 : i32
    %c0_i32_63 = arith.constant 0 : i32
    %110 = tpu.memref_slice %arg6[%c15_i32_62, %c0_i32_63] : memref<16x128xf32, #tpu.memory_space<vmem>> -> memref<1x128xf32, #tpu.memory_space<vmem>>
    %111 = tpu.memref_slice %arg7[%c15_i32_60] : memref<16x!tpu.dma_semaphore, #tpu.memory_space<semaphore_mem>> -> memref<1x!tpu.dma_semaphore, #tpu.memory_space<semaphore_mem>>
    %112 = tpu.memref_squeeze %111 : memref<1x!tpu.dma_semaphore, #tpu.memory_space<semaphore_mem>> -> memref<!tpu.dma_semaphore, #tpu.memory_space<semaphore_mem>>
    tpu.enqueue_dma source(%109 : memref<1x128xf32, #tpu.memory_space<any>>) target(%110 : memref<1x128xf32, #tpu.memory_space<vmem>>) target_semaphore(%112 : memref<!tpu.dma_semaphore, #tpu.memory_space<semaphore_mem>>)
    %c0_i32_64 = arith.constant 0 : i32
    %c0_i32_65 = arith.constant 0 : i32
    %113 = tpu.memref_slice %arg3[%3, %c0_i32_65] : memref<128x128xf32, #tpu.memory_space<any>> -> memref<1x128xf32, #tpu.memory_space<any>>
    %c0_i32_66 = arith.constant 0 : i32
    %c0_i32_67 = arith.constant 0 : i32
    %114 = tpu.memref_slice %arg6[%c0_i32_66, %c0_i32_67] : memref<16x128xf32, #tpu.memory_space<vmem>> -> memref<1x128xf32, #tpu.memory_space<vmem>>
    %115 = tpu.memref_slice %arg7[%c0_i32_64] : memref<16x!tpu.dma_semaphore, #tpu.memory_space<semaphore_mem>> -> memref<1x!tpu.dma_semaphore, #tpu.memory_space<semaphore_mem>>
    %116 = tpu.memref_squeeze %115 : memref<1x!tpu.dma_semaphore, #tpu.memory_space<semaphore_mem>> -> memref<!tpu.dma_semaphore, #tpu.memory_space<semaphore_mem>>
    tpu.wait_dma2 semaphore(%116 : memref<!tpu.dma_semaphore, #tpu.memory_space<semaphore_mem>>) src(%113 : memref<1x128xf32, #tpu.memory_space<any>>) dst(%114 : memref<1x128xf32, #tpu.memory_space<vmem>>)
    %c1_i32_68 = arith.constant 1 : i32
    %c0_i32_69 = arith.constant 0 : i32
    %117 = tpu.memref_slice %arg3[%10, %c0_i32_69] : memref<128x128xf32, #tpu.memory_space<any>> -> memref<1x128xf32, #tpu.memory_space<any>>
    %c1_i32_70 = arith.constant 1 : i32
    %c0_i32_71 = arith.constant 0 : i32
    %118 = tpu.memref_slice %arg6[%c1_i32_70, %c0_i32_71] : memref<16x128xf32, #tpu.memory_space<vmem>> -> memref<1x128xf32, #tpu.memory_space<vmem>>
    %119 = tpu.memref_slice %arg7[%c1_i32_68] : memref<16x!tpu.dma_semaphore, #tpu.memory_space<semaphore_mem>> -> memref<1x!tpu.dma_semaphore, #tpu.memory_space<semaphore_mem>>
    %120 = tpu.memref_squeeze %119 : memref<1x!tpu.dma_semaphore, #tpu.memory_space<semaphore_mem>> -> memref<!tpu.dma_semaphore, #tpu.memory_space<semaphore_mem>>
    tpu.wait_dma2 semaphore(%120 : memref<!tpu.dma_semaphore, #tpu.memory_space<semaphore_mem>>) src(%117 : memref<1x128xf32, #tpu.memory_space<any>>) dst(%118 : memref<1x128xf32, #tpu.memory_space<vmem>>)
    %c2_i32_72 = arith.constant 2 : i32
    %c0_i32_73 = arith.constant 0 : i32
    %121 = tpu.memref_slice %arg3[%17, %c0_i32_73] : memref<128x128xf32, #tpu.memory_space<any>> -> memref<1x128xf32, #tpu.memory_space<any>>
    %c2_i32_74 = arith.constant 2 : i32
    %c0_i32_75 = arith.constant 0 : i32
    %122 = tpu.memref_slice %arg6[%c2_i32_74, %c0_i32_75] : memref<16x128xf32, #tpu.memory_space<vmem>> -> memref<1x128xf32, #tpu.memory_space<vmem>>
    %123 = tpu.memref_slice %arg7[%c2_i32_72] : memref<16x!tpu.dma_semaphore, #tpu.memory_space<semaphore_mem>> -> memref<1x!tpu.dma_semaphore, #tpu.memory_space<semaphore_mem>>
    %124 = tpu.memref_squeeze %123 : memref<1x!tpu.dma_semaphore, #tpu.memory_space<semaphore_mem>> -> memref<!tpu.dma_semaphore, #tpu.memory_space<semaphore_mem>>
    tpu.wait_dma2 semaphore(%124 : memref<!tpu.dma_semaphore, #tpu.memory_space<semaphore_mem>>) src(%121 : memref<1x128xf32, #tpu.memory_space<any>>) dst(%122 : memref<1x128xf32, #tpu.memory_space<vmem>>)
    %c3_i32_76 = arith.constant 3 : i32
    %c0_i32_77 = arith.constant 0 : i32
    %125 = tpu.memref_slice %arg3[%24, %c0_i32_77] : memref<128x128xf32, #tpu.memory_space<any>> -> memref<1x128xf32, #tpu.memory_space<any>>
    %c3_i32_78 = arith.constant 3 : i32
    %c0_i32_79 = arith.constant 0 : i32
    %126 = tpu.memref_slice %arg6[%c3_i32_78, %c0_i32_79] : memref<16x128xf32, #tpu.memory_space<vmem>> -> memref<1x128xf32, #tpu.memory_space<vmem>>
    %127 = tpu.memref_slice %arg7[%c3_i32_76] : memref<16x!tpu.dma_semaphore, #tpu.memory_space<semaphore_mem>> -> memref<1x!tpu.dma_semaphore, #tpu.memory_space<semaphore_mem>>
    %128 = tpu.memref_squeeze %127 : memref<1x!tpu.dma_semaphore, #tpu.memory_space<semaphore_mem>> -> memref<!tpu.dma_semaphore, #tpu.memory_space<semaphore_mem>>
    tpu.wait_dma2 semaphore(%128 : memref<!tpu.dma_semaphore, #tpu.memory_space<semaphore_mem>>) src(%125 : memref<1x128xf32, #tpu.memory_space<any>>) dst(%126 : memref<1x128xf32, #tpu.memory_space<vmem>>)
    %c4_i32_80 = arith.constant 4 : i32
    %c0_i32_81 = arith.constant 0 : i32
    %129 = tpu.memref_slice %arg3[%31, %c0_i32_81] : memref<128x128xf32, #tpu.memory_space<any>> -> memref<1x128xf32, #tpu.memory_space<any>>
    %c4_i32_82 = arith.constant 4 : i32
    %c0_i32_83 = arith.constant 0 : i32
    %130 = tpu.memref_slice %arg6[%c4_i32_82, %c0_i32_83] : memref<16x128xf32, #tpu.memory_space<vmem>> -> memref<1x128xf32, #tpu.memory_space<vmem>>
    %131 = tpu.memref_slice %arg7[%c4_i32_80] : memref<16x!tpu.dma_semaphore, #tpu.memory_space<semaphore_mem>> -> memref<1x!tpu.dma_semaphore, #tpu.memory_space<semaphore_mem>>
    %132 = tpu.memref_squeeze %131 : memref<1x!tpu.dma_semaphore, #tpu.memory_space<semaphore_mem>> -> memref<!tpu.dma_semaphore, #tpu.memory_space<semaphore_mem>>
    tpu.wait_dma2 semaphore(%132 : memref<!tpu.dma_semaphore, #tpu.memory_space<semaphore_mem>>) src(%129 : memref<1x128xf32, #tpu.memory_space<any>>) dst(%130 : memref<1x128xf32, #tpu.memory_space<vmem>>)
    %c5_i32_84 = arith.constant 5 : i32
    %c0_i32_85 = arith.constant 0 : i32
    %133 = tpu.memref_slice %arg3[%38, %c0_i32_85] : memref<128x128xf32, #tpu.memory_space<any>> -> memref<1x128xf32, #tpu.memory_space<any>>
    %c5_i32_86 = arith.constant 5 : i32
    %c0_i32_87 = arith.constant 0 : i32
    %134 = tpu.memref_slice %arg6[%c5_i32_86, %c0_i32_87] : memref<16x128xf32, #tpu.memory_space<vmem>> -> memref<1x128xf32, #tpu.memory_space<vmem>>
    %135 = tpu.memref_slice %arg7[%c5_i32_84] : memref<16x!tpu.dma_semaphore, #tpu.memory_space<semaphore_mem>> -> memref<1x!tpu.dma_semaphore, #tpu.memory_space<semaphore_mem>>
    %136 = tpu.memref_squeeze %135 : memref<1x!tpu.dma_semaphore, #tpu.memory_space<semaphore_mem>> -> memref<!tpu.dma_semaphore, #tpu.memory_space<semaphore_mem>>
    tpu.wait_dma2 semaphore(%136 : memref<!tpu.dma_semaphore, #tpu.memory_space<semaphore_mem>>) src(%133 : memref<1x128xf32, #tpu.memory_space<any>>) dst(%134 : memref<1x128xf32, #tpu.memory_space<vmem>>)
    %c6_i32_88 = arith.constant 6 : i32
    %c0_i32_89 = arith.constant 0 : i32
    %137 = tpu.memref_slice %arg3[%45, %c0_i32_89] : memref<128x128xf32, #tpu.memory_space<any>> -> memref<1x128xf32, #tpu.memory_space<any>>
    %c6_i32_90 = arith.constant 6 : i32
    %c0_i32_91 = arith.constant 0 : i32
    %138 = tpu.memref_slice %arg6[%c6_i32_90, %c0_i32_91] : memref<16x128xf32, #tpu.memory_space<vmem>> -> memref<1x128xf32, #tpu.memory_space<vmem>>
    %139 = tpu.memref_slice %arg7[%c6_i32_88] : memref<16x!tpu.dma_semaphore, #tpu.memory_space<semaphore_mem>> -> memref<1x!tpu.dma_semaphore, #tpu.memory_space<semaphore_mem>>
    %140 = tpu.memref_squeeze %139 : memref<1x!tpu.dma_semaphore, #tpu.memory_space<semaphore_mem>> -> memref<!tpu.dma_semaphore, #tpu.memory_space<semaphore_mem>>
    tpu.wait_dma2 semaphore(%140 : memref<!tpu.dma_semaphore, #tpu.memory_space<semaphore_mem>>) src(%137 : memref<1x128xf32, #tpu.memory_space<any>>) dst(%138 : memref<1x128xf32, #tpu.memory_space<vmem>>)
    %c7_i32_92 = arith.constant 7 : i32
    %c0_i32_93 = arith.constant 0 : i32
    %141 = tpu.memref_slice %arg3[%52, %c0_i32_93] : memref<128x128xf32, #tpu.memory_space<any>> -> memref<1x128xf32, #tpu.memory_space<any>>
    %c7_i32_94 = arith.constant 7 : i32
    %c0_i32_95 = arith.constant 0 : i32
    %142 = tpu.memref_slice %arg6[%c7_i32_94, %c0_i32_95] : memref<16x128xf32, #tpu.memory_space<vmem>> -> memref<1x128xf32, #tpu.memory_space<vmem>>
    %143 = tpu.memref_slice %arg7[%c7_i32_92] : memref<16x!tpu.dma_semaphore, #tpu.memory_space<semaphore_mem>> -> memref<1x!tpu.dma_semaphore, #tpu.memory_space<semaphore_mem>>
    %144 = tpu.memref_squeeze %143 : memref<1x!tpu.dma_semaphore, #tpu.memory_space<semaphore_mem>> -> memref<!tpu.dma_semaphore, #tpu.memory_space<semaphore_mem>>
    tpu.wait_dma2 semaphore(%144 : memref<!tpu.dma_semaphore, #tpu.memory_space<semaphore_mem>>) src(%141 : memref<1x128xf32, #tpu.memory_space<any>>) dst(%142 : memref<1x128xf32, #tpu.memory_space<vmem>>)
    %c8_i32_96 = arith.constant 8 : i32
    %c0_i32_97 = arith.constant 0 : i32
    %145 = tpu.memref_slice %arg3[%59, %c0_i32_97] : memref<128x128xf32, #tpu.memory_space<any>> -> memref<1x128xf32, #tpu.memory_space<any>>
    %c8_i32_98 = arith.constant 8 : i32
    %c0_i32_99 = arith.constant 0 : i32
    %146 = tpu.memref_slice %arg6[%c8_i32_98, %c0_i32_99] : memref<16x128xf32, #tpu.memory_space<vmem>> -> memref<1x128xf32, #tpu.memory_space<vmem>>
    %147 = tpu.memref_slice %arg7[%c8_i32_96] : memref<16x!tpu.dma_semaphore, #tpu.memory_space<semaphore_mem>> -> memref<1x!tpu.dma_semaphore, #tpu.memory_space<semaphore_mem>>
    %148 = tpu.memref_squeeze %147 : memref<1x!tpu.dma_semaphore, #tpu.memory_space<semaphore_mem>> -> memref<!tpu.dma_semaphore, #tpu.memory_space<semaphore_mem>>
    tpu.wait_dma2 semaphore(%148 : memref<!tpu.dma_semaphore, #tpu.memory_space<semaphore_mem>>) src(%145 : memref<1x128xf32, #tpu.memory_space<any>>) dst(%146 : memref<1x128xf32, #tpu.memory_space<vmem>>)
    %c9_i32_100 = arith.constant 9 : i32
    %c0_i32_101 = arith.constant 0 : i32
    %149 = tpu.memref_slice %arg3[%66, %c0_i32_101] : memref<128x128xf32, #tpu.memory_space<any>> -> memref<1x128xf32, #tpu.memory_space<any>>
    %c9_i32_102 = arith.constant 9 : i32
    %c0_i32_103 = arith.constant 0 : i32
    %150 = tpu.memref_slice %arg6[%c9_i32_102, %c0_i32_103] : memref<16x128xf32, #tpu.memory_space<vmem>> -> memref<1x128xf32, #tpu.memory_space<vmem>>
    %151 = tpu.memref_slice %arg7[%c9_i32_100] : memref<16x!tpu.dma_semaphore, #tpu.memory_space<semaphore_mem>> -> memref<1x!tpu.dma_semaphore, #tpu.memory_space<semaphore_mem>>
    %152 = tpu.memref_squeeze %151 : memref<1x!tpu.dma_semaphore, #tpu.memory_space<semaphore_mem>> -> memref<!tpu.dma_semaphore, #tpu.memory_space<semaphore_mem>>
    tpu.wait_dma2 semaphore(%152 : memref<!tpu.dma_semaphore, #tpu.memory_space<semaphore_mem>>) src(%149 : memref<1x128xf32, #tpu.memory_space<any>>) dst(%150 : memref<1x128xf32, #tpu.memory_space<vmem>>)
    %c10_i32_104 = arith.constant 10 : i32
    %c0_i32_105 = arith.constant 0 : i32
    %153 = tpu.memref_slice %arg3[%73, %c0_i32_105] : memref<128x128xf32, #tpu.memory_space<any>> -> memref<1x128xf32, #tpu.memory_space<any>>
    %c10_i32_106 = arith.constant 10 : i32
    %c0_i32_107 = arith.constant 0 : i32
    %154 = tpu.memref_slice %arg6[%c10_i32_106, %c0_i32_107] : memref<16x128xf32, #tpu.memory_space<vmem>> -> memref<1x128xf32, #tpu.memory_space<vmem>>
    %155 = tpu.memref_slice %arg7[%c10_i32_104] : memref<16x!tpu.dma_semaphore, #tpu.memory_space<semaphore_mem>> -> memref<1x!tpu.dma_semaphore, #tpu.memory_space<semaphore_mem>>
    %156 = tpu.memref_squeeze %155 : memref<1x!tpu.dma_semaphore, #tpu.memory_space<semaphore_mem>> -> memref<!tpu.dma_semaphore, #tpu.memory_space<semaphore_mem>>
    tpu.wait_dma2 semaphore(%156 : memref<!tpu.dma_semaphore, #tpu.memory_space<semaphore_mem>>) src(%153 : memref<1x128xf32, #tpu.memory_space<any>>) dst(%154 : memref<1x128xf32, #tpu.memory_space<vmem>>)
    %c11_i32_108 = arith.constant 11 : i32
    %c0_i32_109 = arith.constant 0 : i32
    %157 = tpu.memref_slice %arg3[%80, %c0_i32_109] : memref<128x128xf32, #tpu.memory_space<any>> -> memref<1x128xf32, #tpu.memory_space<any>>
    %c11_i32_110 = arith.constant 11 : i32
    %c0_i32_111 = arith.constant 0 : i32
    %158 = tpu.memref_slice %arg6[%c11_i32_110, %c0_i32_111] : memref<16x128xf32, #tpu.memory_space<vmem>> -> memref<1x128xf32, #tpu.memory_space<vmem>>
    %159 = tpu.memref_slice %arg7[%c11_i32_108] : memref<16x!tpu.dma_semaphore, #tpu.memory_space<semaphore_mem>> -> memref<1x!tpu.dma_semaphore, #tpu.memory_space<semaphore_mem>>
    %160 = tpu.memref_squeeze %159 : memref<1x!tpu.dma_semaphore, #tpu.memory_space<semaphore_mem>> -> memref<!tpu.dma_semaphore, #tpu.memory_space<semaphore_mem>>
    tpu.wait_dma2 semaphore(%160 : memref<!tpu.dma_semaphore, #tpu.memory_space<semaphore_mem>>) src(%157 : memref<1x128xf32, #tpu.memory_space<any>>) dst(%158 : memref<1x128xf32, #tpu.memory_space<vmem>>)
    %c12_i32_112 = arith.constant 12 : i32
    %c0_i32_113 = arith.constant 0 : i32
    %161 = tpu.memref_slice %arg3[%87, %c0_i32_113] : memref<128x128xf32, #tpu.memory_space<any>> -> memref<1x128xf32, #tpu.memory_space<any>>
    %c12_i32_114 = arith.constant 12 : i32
    %c0_i32_115 = arith.constant 0 : i32
    %162 = tpu.memref_slice %arg6[%c12_i32_114, %c0_i32_115] : memref<16x128xf32, #tpu.memory_space<vmem>> -> memref<1x128xf32, #tpu.memory_space<vmem>>
    %163 = tpu.memref_slice %arg7[%c12_i32_112] : memref<16x!tpu.dma_semaphore, #tpu.memory_space<semaphore_mem>> -> memref<1x!tpu.dma_semaphore, #tpu.memory_space<semaphore_mem>>
    %164 = tpu.memref_squeeze %163 : memref<1x!tpu.dma_semaphore, #tpu.memory_space<semaphore_mem>> -> memref<!tpu.dma_semaphore, #tpu.memory_space<semaphore_mem>>
    tpu.wait_dma2 semaphore(%164 : memref<!tpu.dma_semaphore, #tpu.memory_space<semaphore_mem>>) src(%161 : memref<1x128xf32, #tpu.memory_space<any>>) dst(%162 : memref<1x128xf32, #tpu.memory_space<vmem>>)
    %c13_i32_116 = arith.constant 13 : i32
    %c0_i32_117 = arith.constant 0 : i32
    %165 = tpu.memref_slice %arg3[%94, %c0_i32_117] : memref<128x128xf32, #tpu.memory_space<any>> -> memref<1x128xf32, #tpu.memory_space<any>>
    %c13_i32_118 = arith.constant 13 : i32
    %c0_i32_119 = arith.constant 0 : i32
    %166 = tpu.memref_slice %arg6[%c13_i32_118, %c0_i32_119] : memref<16x128xf32, #tpu.memory_space<vmem>> -> memref<1x128xf32, #tpu.memory_space<vmem>>
    %167 = tpu.memref_slice %arg7[%c13_i32_116] : memref<16x!tpu.dma_semaphore, #tpu.memory_space<semaphore_mem>> -> memref<1x!tpu.dma_semaphore, #tpu.memory_space<semaphore_mem>>
    %168 = tpu.memref_squeeze %167 : memref<1x!tpu.dma_semaphore, #tpu.memory_space<semaphore_mem>> -> memref<!tpu.dma_semaphore, #tpu.memory_space<semaphore_mem>>
    tpu.wait_dma2 semaphore(%168 : memref<!tpu.dma_semaphore, #tpu.memory_space<semaphore_mem>>) src(%165 : memref<1x128xf32, #tpu.memory_space<any>>) dst(%166 : memref<1x128xf32, #tpu.memory_space<vmem>>)
    %c14_i32_120 = arith.constant 14 : i32
    %c0_i32_121 = arith.constant 0 : i32
    %169 = tpu.memref_slice %arg3[%101, %c0_i32_121] : memref<128x128xf32, #tpu.memory_space<any>> -> memref<1x128xf32, #tpu.memory_space<any>>
    %c14_i32_122 = arith.constant 14 : i32
    %c0_i32_123 = arith.constant 0 : i32
    %170 = tpu.memref_slice %arg6[%c14_i32_122, %c0_i32_123] : memref<16x128xf32, #tpu.memory_space<vmem>> -> memref<1x128xf32, #tpu.memory_space<vmem>>
    %171 = tpu.memref_slice %arg7[%c14_i32_120] : memref<16x!tpu.dma_semaphore, #tpu.memory_space<semaphore_mem>> -> memref<1x!tpu.dma_semaphore, #tpu.memory_space<semaphore_mem>>
    %172 = tpu.memref_squeeze %171 : memref<1x!tpu.dma_semaphore, #tpu.memory_space<semaphore_mem>> -> memref<!tpu.dma_semaphore, #tpu.memory_space<semaphore_mem>>
    tpu.wait_dma2 semaphore(%172 : memref<!tpu.dma_semaphore, #tpu.memory_space<semaphore_mem>>) src(%169 : memref<1x128xf32, #tpu.memory_space<any>>) dst(%170 : memref<1x128xf32, #tpu.memory_space<vmem>>)
    %c15_i32_124 = arith.constant 15 : i32
    %c0_i32_125 = arith.constant 0 : i32
    %173 = tpu.memref_slice %arg3[%108, %c0_i32_125] : memref<128x128xf32, #tpu.memory_space<any>> -> memref<1x128xf32, #tpu.memory_space<any>>
    %c15_i32_126 = arith.constant 15 : i32
    %c0_i32_127 = arith.constant 0 : i32
    %174 = tpu.memref_slice %arg6[%c15_i32_126, %c0_i32_127] : memref<16x128xf32, #tpu.memory_space<vmem>> -> memref<1x128xf32, #tpu.memory_space<vmem>>
    %175 = tpu.memref_slice %arg7[%c15_i32_124] : memref<16x!tpu.dma_semaphore, #tpu.memory_space<semaphore_mem>> -> memref<1x!tpu.dma_semaphore, #tpu.memory_space<semaphore_mem>>
    %176 = tpu.memref_squeeze %175 : memref<1x!tpu.dma_semaphore, #tpu.memory_space<semaphore_mem>> -> memref<!tpu.dma_semaphore, #tpu.memory_space<semaphore_mem>>
    tpu.wait_dma2 semaphore(%176 : memref<!tpu.dma_semaphore, #tpu.memory_space<semaphore_mem>>) src(%173 : memref<1x128xf32, #tpu.memory_space<any>>) dst(%174 : memref<1x128xf32, #tpu.memory_space<vmem>>)
    %c0 = arith.constant 0 : index
    %c0_128 = arith.constant 0 : index
    %177 = vector.load %arg6[%c0, %c0_128] : memref<16x128xf32, #tpu.memory_space<vmem>>, vector<16x128xf32>
    %c0_129 = arith.constant 0 : index
    %c0_130 = arith.constant 0 : index
    %178 = vector.load %arg4[%c0_129, %c0_130] : memref<16x128xf32, #tpu.memory_space<vmem>>, vector<16x128xf32>
    tpu.vector_store %arg4[%c0_129, %c0_130], %177 {strides = array<i32>} : memref<16x128xf32, #tpu.memory_space<vmem>>, vector<16x128xf32>,
    %c0_131 = arith.constant 0 : index
    %c0_132 = arith.constant 0 : index
    %179 = vector.load %arg2[%c0_131, %c0_132] : memref<16x1xi32, #tpu.memory_space<vmem>>, vector<16x1xi32>
    %180 = tpu.iota {dimensions = array<i32: 1>} : vector<16x128xi32>
    %181 = vector.broadcast %179 : vector<16x1xi32> to vector<16x128xi32>
    %182 = arith.cmpi eq, %180, %181 : vector<16x128xi32>
    %cst = arith.constant 0.000000e+00 : f32
    %183 = vector.broadcast %cst : f32 to vector<16x128xf32>
    %184 = arith.select %182, %177, %183 : vector<16x128xi1>, vector<16x128xf32>
    %cst_133 = arith.constant dense<0.000000e+00> : vector<16xf32>
    %185 = vector.multi_reduction <add>, %184, %cst_133 [1] : vector<16x128xf32> to vector<16xf32>
    %186 = vector.shape_cast %185 : vector<16xf32> to vector<16x1xf32>
    %cst_134 = arith.constant dense<0xFF800000> : vector<16xf32>
    %187 = vector.multi_reduction <maximumf>, %177, %cst_134 [1] : vector<16x128xf32> to vector<16xf32>
    %188 = vector.shape_cast %187 : vector<16xf32> to vector<16x1xf32>
    %189 = vector.broadcast %188 : vector<16x1xf32> to vector<16x128xf32>
    %190 = arith.subf %177, %189 : vector<16x128xf32>
    %191 = math.exp %190 : vector<16x128xf32>
    %cst_135 = arith.constant dense<0.000000e+00> : vector<16xf32>
    %192 = vector.multi_reduction <add>, %191, %cst_135 [1] : vector<16x128xf32> to vector<16xf32>
    %193 = vector.shape_cast %192 : vector<16xf32> to vector<16x1xf32>
    %194 = math.log %193 : vector<16x1xf32>
    %195 = arith.addf %188, %194 : vector<16x1xf32>
    %196 = arith.subf %195, %186 : vector<16x1xf32>
    %197 = vector.shape_cast %196 : vector<16x1xf32> to vector<16x1xf32>
    %198 = vector.broadcast %197 : vector<16x1xf32> to vector<16x128xf32>
    %c0_136 = arith.constant 0 : index
    %c0_137 = arith.constant 0 : index
    %199 = vector.load %arg5[%c0_136, %c0_137] : memref<16x128xf32, #tpu.memory_space<vmem>>, vector<16x128xf32>
    tpu.vector_store %arg5[%c0_136, %c0_137], %198 {strides = array<i32>} : memref<16x128xf32, #tpu.memory_space<vmem>>, vector<16x128xf32>,
    return
  }
  func.func @transform_0(%arg0: i32, %arg1: memref<16xi32, #tpu.memory_space<smem>>) -> (i32, i32) {
    %c0_i32 = arith.constant 0 : i32
    %c0_i32_0 = arith.constant 0 : i32
    return %arg0, %c0_i32 : i32, i32
  }
  func.func @transform_2(%arg0: i32, %arg1: memref<16xi32, #tpu.memory_space<smem>>) -> (i32, i32) {
    %c0_i32 = arith.constant 0 : i32
    %c0_i32_0 = arith.constant 0 : i32
    return %arg0, %c0_i32 : i32, i32
  }
  func.func @transform_3(%arg0: i32, %arg1: memref<16xi32, #tpu.memory_space<smem>>) -> (i32, i32) {
    %c0_i32 = arith.constant 0 : i32
    %c0_i32_0 = arith.constant 0 : i32
    return %arg0, %c0_i32 : i32, i32
  }
}

</mosaic_0001>

<llo_original>
// kernel: tpu_custom_call.1
$region0: #{tpu_custom_call.1}
  #allocation0 [shape = 'u32[]', space=smem, size = 0x4, offset = 0x4, fixed_abs, tag = 'smem constant byte address 0x4 - core index']
  #allocation1 [shape = 'u32[144,128]{1,0:T(1,128)}', space=vmem, size = 0x12000, scoped, tag = 'internal scratch']
  #allocation2 [shape = 'f32[16,128]{1,0:T(8,128)}', space=vmem, size = 0x2000, scoped, tag = 'scratch operand']
  #allocation3 [shape = 's32[16]{0}', space=sflag, size = 0x40, scoped, tag = 'scratch operand']
  #allocation4 [shape = 's32[1]{0}', space=sflag, size = 0x4, scoped, tag = 'scoped memory for tpu_custom_call.1']
  #allocation5 [shape = 'u8[512]{0}', space=smem, size = 0x200, scoped, tag = 'prefetched SMEM operand 0']
  #allocation10 [shape = 's32[]', space=sflag, size = 0x4, offset = 0, fixed_abs, tag = 'sflag constant byte address 0x0 - dummy sync flag']
  #allocation11 [shape = 's32[]', space=sflag, size = 0x4, offset = 0, fixed_abs, tag = 'sflag constant byte address 0x0 - dummy sync flag']
  #allocation12 [shape = 'u32[]', space=smem, size = 0x4, offset = 0x44, fixed_abs, tag = 'smem constant byte address 0x44 - assertion arg 0']
  #allocation13 [shape = 'u32[]', space=smem, size = 0x4, offset = 0x48, fixed_abs, tag = 'smem constant byte address 0x48 - assertion arg 1']
  #allocation14 [shape = 's32[]', space=sflag, size = 0x4, offset = 0, fixed_abs, tag = 'sflag constant byte address 0x0 - dummy sync flag']
  #allocation15 [shape = 's32[]', space=sflag, size = 0x4, offset = 0, fixed_abs, tag = 'sflag constant byte address 0x0 - dummy sync flag']
  #allocation16 [shape = 's32[]', space=sflag, size = 0x4, offset = 0, fixed_abs, tag = 'sflag constant byte address 0x0 - dummy sync flag']
  #allocation17 [shape = 's32[]', space=sflag, size = 0x4, offset = 0, fixed_abs, tag = 'sflag constant byte address 0x0 - dummy sync flag']
  #allocation18 [shape = 's32[]', space=sflag, size = 0x4, offset = 0, fixed_abs, tag = 'sflag constant byte address 0x0 - dummy sync flag']
  #allocation19 [shape = 's32[]', space=sflag, size = 0x4, offset = 0, fixed_abs, tag = 'sflag constant byte address 0x0 - dummy sync flag']
  #allocation20 [shape = 's32[]', space=sflag, size = 0x4, offset = 0, fixed_abs, tag = 'sflag constant byte address 0x0 - dummy sync flag']
  #allocation21 [shape = 's32[]', space=sflag, size = 0x4, offset = 0, fixed_abs, tag = 'sflag constant byte address 0x0 - dummy sync flag']
  #allocation22 [shape = 's32[]', space=sflag, size = 0x4, offset = 0, fixed_abs, tag = 'sflag constant byte address 0x0 - dummy sync flag']
  #allocation23 [shape = 's32[]', space=sflag, size = 0x4, offset = 0, fixed_abs, tag = 'sflag constant byte address 0x0 - dummy sync flag']
  #allocation24 [shape = 's32[]', space=sflag, size = 0x4, offset = 0, fixed_abs, tag = 'sflag constant byte address 0x0 - dummy sync flag']
  #allocation25 [shape = 's32[]', space=sflag, size = 0x4, offset = 0, fixed_abs, tag = 'sflag constant byte address 0x0 - dummy sync flag']
  #allocation26 [shape = 's32[]', space=sflag, size = 0x4, offset = 0, fixed_abs, tag = 'sflag constant byte address 0x0 - dummy sync flag']
  #allocation27 [shape = 's32[]', space=sflag, size = 0x4, offset = 0, fixed_abs, tag = 'sflag constant byte address 0x0 - dummy sync flag']
  #allocation28 [shape = 's32[]', space=sflag, size = 0x4, offset = 0, fixed_abs, tag = 'sflag constant byte address 0x0 - dummy sync flag']
  #allocation29 [shape = 's32[]', space=sflag, size = 0x4, offset = 0, fixed_abs, tag = 'sflag constant byte address 0x0 - dummy sync flag']
  #allocation30 [shape = 's32[]', space=sflag, size = 0x4, offset = 0, fixed_abs, tag = 'sflag constant byte address 0x0 - dummy sync flag']
  #allocation31 [shape = 's32[]', space=sflag, size = 0x4, offset = 0, fixed_abs, tag = 'sflag constant byte address 0x0 - dummy sync flag']
  #allocation32 [shape = 's32[]', space=sflag, size = 0x4, offset = 0, fixed_abs, tag = 'sflag constant byte address 0x0 - dummy sync flag']
  #allocation33 [shape = 's32[]', space=sflag, size = 0x4, offset = 0, fixed_abs, tag = 'sflag constant byte address 0x0 - dummy sync flag']
  #allocation34 [shape = 's32[]', space=sflag, size = 0x4, offset = 0, fixed_abs, tag = 'sflag constant byte address 0x0 - dummy sync flag']
  #allocation35 [shape = 's32[]', space=sflag, size = 0x4, offset = 0, fixed_abs, tag = 'sflag constant byte address 0x0 - dummy sync flag']
  #allocation36 [shape = 's32[]', space=sflag, size = 0x4, offset = 0, fixed_abs, tag = 'sflag constant byte address 0x0 - dummy sync flag']
  #allocation37 [shape = 's32[]', space=sflag, size = 0x4, offset = 0, fixed_abs, tag = 'sflag constant byte address 0x0 - dummy sync flag']
  #allocation38 [shape = 's32[]', space=sflag, size = 0x4, offset = 0, fixed_abs, tag = 'sflag constant byte address 0x0 - dummy sync flag']
  #allocation39 [shape = 's32[]', space=sflag, size = 0x4, offset = 0, fixed_abs, tag = 'sflag constant byte address 0x0 - dummy sync flag']
  #allocation40 [shape = 's32[]', space=sflag, size = 0x4, offset = 0, fixed_abs, tag = 'sflag constant byte address 0x0 - dummy sync flag']
  #allocation41 [shape = 's32[]', space=sflag, size = 0x4, offset = 0, fixed_abs, tag = 'sflag constant byte address 0x0 - dummy sync flag']
  #allocation42 [shape = 's32[]', space=sflag, size = 0x4, offset = 0, fixed_abs, tag = 'sflag constant byte address 0x0 - dummy sync flag']
  #allocation43 [shape = 's32[]', space=sflag, size = 0x4, offset = 0, fixed_abs, tag = 'sflag constant byte address 0x0 - dummy sync flag']
  %s0 = inlined_call_operand.vmem [shape: s32[16], index: 0, kind: input, shape index: {}]
  %s1 = inlined_call_operand.vmem [shape: s32[16,1], index: 1, kind: input, shape index: {}]
  %s2 = inlined_call_operand.hbm [shape: f32[128,128], index: 2, kind: input, shape index: {}]
  %s3 = inlined_call_operand.hbm [shape: f32[16,128], index: 3, kind: output, shape index: {0}]
  %s4 = inlined_call_operand.hbm [shape: f32[16,128], index: 4, kind: output, shape index: {1}]
  %5 = xla_tuple %s3, %s4
  %s6 = sld [smem:[#allocation0]]
  $region86: #{tpu_custom_call.1} parent=0
    _
  %s8 = ssub.s32 1, %s6
  %s9 = scalar_select 0, %s8, %s6
  %s10 = sshll.u32 %s0, 4
  %s11 = int_to_ptr.vmem [resolvable:$true] %s10
  %13 = dma.vmem_to_smem %s11, 16, [#allocation5], [#allocation4]
  %14 = dma.done [#allocation4], 16
  %15 = sfence
  $region1: #{tpu_custom_call.1} parent=0
    #allocation6 [shape = 'u8[8192]{0}', space=vmem, size = 0x2000, scoped, tag = 'output window, operand 0, single buffered']
    #allocation7 [shape = 's32[1]{0}', space=sflag, size = 0x4, scoped, tag = 'scoped memory for tpu_custom_call.1']
    #allocation8 [shape = 'u8[8192]{0}', space=vmem, size = 0x2000, scoped, tag = 'output window, operand 1, single buffered']
    #allocation9 [shape = 's32[1]{0}', space=sflag, size = 0x4, scoped, tag = 'scoped memory for tpu_custom_call.1']
    %16 = vsyncpa [#allocation7], 0
    %17 = vsyncpa [#allocation9], 0
    // Predicated region
    $region2: #{tpu_custom_call.1} parent=1 // pred_check
      _
    $region3: #{tpu_custom_call.1} parent=1 // pred_check_branch
      %19 = sbr.rel (0) target = $region5
    $region4: #{tpu_custom_call.1} parent=1 // pred_region
      _
    $region5: #{tpu_custom_call.1} parent=1 // pred_fallthru
      _
    %s20 = smul.u32 0, 16
    %s21 = sld [smem:[#allocation5 + %s20]]
    %s22 = smul.addr %s21, 16
    %s23 = scalar_lea.hbm %s2, %s22
    // Predicated region
    $region6: #{tpu_custom_call.1} parent=1 // pred_check
      _
    $region7: #{tpu_custom_call.1} parent=1 // pred_check_branch
      %25 = sbr.rel target = $region9
    $region8: #{tpu_custom_call.1} parent=1 // pred_region
      %26 = sst [smem:[#allocation12]] [#allocation11]
      %27 = sst [smem:[#allocation13]] [#allocation10]
    $region9: #{tpu_custom_call.1} parent=1 // pred_fallthru
      _
    %29 = shalt.err (0)
    %s31 = sshll.u32 [#allocation2], 4
    %s32 = int_to_ptr.vmem [resolvable:$true] %s31
    %34 = dma.hbm_to_vmem [thread:$0]  %s23, 16, %s32, [#allocation3]
    %s35 = sadd.s32 %s20, 1
    %s36 = sld [smem:[#allocation5 + %s35]]
    %s37 = smul.addr %s36, 16
    %s38 = scalar_lea.hbm %s2, %s37
    %s39 = scalar_lea.vmem [#allocation2], 1
    %s40 = scalar_lea.sflag [#allocation3], 1
    // Predicated region
    $region10: #{tpu_custom_call.1} parent=1 // pred_check
      _
    $region11: #{tpu_custom_call.1} parent=1 // pred_check_branch
      %42 = sbr.rel target = $region13
    $region12: #{tpu_custom_call.1} parent=1 // pred_region
      %43 = sst [smem:[#allocation12]] [#allocation15]
      %44 = sst [smem:[#allocation13]] [#allocation14]
    $region13: #{tpu_custom_call.1} parent=1 // pred_fallthru
      _
    %46 = shalt.err (0)
    %s48 = sshll.u32 %s39, 4
    %s49 = int_to_ptr.vmem [resolvable:$true] %s48
    %51 = dma.hbm_to_vmem [thread:$0]  %s38, 16, %s49, %s40
    %s52 = sadd.s32 %s20, 2
    %s53 = sld [smem:[#allocation5 + %s52]]
    %s54 = smul.addr %s53, 16
    %s55 = scalar_lea.hbm %s2, %s54
    %s56 = scalar_lea.vmem [#allocation2], 2
    %s57 = scalar_lea.sflag [#allocation3], 2
    // Predicated region
    $region14: #{tpu_custom_call.1} parent=1 // pred_check
      _
    $region15: #{tpu_custom_call.1} parent=1 // pred_check_branch
      %59 = sbr.rel target = $region17
    $region16: #{tpu_custom_call.1} parent=1 // pred_region
      %60 = sst [smem:[#allocation12]] [#allocation17]
      %61 = sst [smem:[#allocation13]] [#allocation16]
    $region17: #{tpu_custom_call.1} parent=1 // pred_fallthru
      _
    %63 = shalt.err (0)
    %s65 = sshll.u32 %s56, 4
    %s66 = int_to_ptr.vmem [resolvable:$true] %s65
    %68 = dma.hbm_to_vmem [thread:$0]  %s55, 16, %s66, %s57
    %s69 = sadd.s32 %s20, 3
    %s70 = sld [smem:[#allocation5 + %s69]]
    %s71 = smul.addr %s70, 16
    %s72 = scalar_lea.hbm %s2, %s71
    %s73 = scalar_lea.vmem [#allocation2], 3
    %s74 = scalar_lea.sflag [#allocation3], 3
    // Predicated region
    $region18: #{tpu_custom_call.1} parent=1 // pred_check
      _
    $region19: #{tpu_custom_call.1} parent=1 // pred_check_branch
      %76 = sbr.rel target = $region21
    $region20: #{tpu_custom_call.1} parent=1 // pred_region
      %77 = sst [smem:[#allocation12]] [#allocation19]
      %78 = sst [smem:[#allocation13]] [#allocation18]
    $region21: #{tpu_custom_call.1} parent=1 // pred_fallthru
      _
    %80 = shalt.err (0)
    %s82 = sshll.u32 %s73, 4
    %s83 = int_to_ptr.vmem [resolvable:$true] %s82
    %85 = dma.hbm_to_vmem [thread:$0]  %s72, 16, %s83, %s74
    %s86 = sadd.s32 %s20, 4
    %s87 = sld [smem:[#allocation5 + %s86]]
    %s88 = smul.addr %s87, 16
    %s89 = scalar_lea.hbm %s2, %s88
    %s90 = scalar_lea.vmem [#allocation2], 4
    %s91 = scalar_lea.sflag [#allocation3], 4
    // Predicated region
    $region22: #{tpu_custom_call.1} parent=1 // pred_check
      _
    $region23: #{tpu_custom_call.1} parent=1 // pred_check_branch
      %93 = sbr.rel target = $region25
    $region24: #{tpu_custom_call.1} parent=1 // pred_region
      %94 = sst [smem:[#allocation12]] [#allocation21]
      %95 = sst [smem:[#allocation13]] [#allocation20]
    $region25: #{tpu_custom_call.1} parent=1 // pred_fallthru
      _
    %97 = shalt.err (0)
    %s99 = sshll.u32 %s90, 4
    %s100 = int_to_ptr.vmem [resolvable:$true] %s99
    %102 = dma.hbm_to_vmem [thread:$0]  %s89, 16, %s100, %s91
    %s103 = sadd.s32 %s20, 5
    %s104 = sld [smem:[#allocation5 + %s103]]
    %s105 = smul.addr %s104, 16
    %s106 = scalar_lea.hbm %s2, %s105
    %s107 = scalar_lea.vmem [#allocation2], 5
    %s108 = scalar_lea.sflag [#allocation3], 5
    // Predicated region
    $region26: #{tpu_custom_call.1} parent=1 // pred_check
      _
    $region27: #{tpu_custom_call.1} parent=1 // pred_check_branch
      %110 = sbr.rel target = $region29
    $region28: #{tpu_custom_call.1} parent=1 // pred_region
      %111 = sst [smem:[#allocation12]] [#allocation23]
      %112 = sst [smem:[#allocation13]] [#allocation22]
    $region29: #{tpu_custom_call.1} parent=1 // pred_fallthru
      _
    %114 = shalt.err (0)
    %s116 = sshll.u32 %s107, 4
    %s117 = int_to_ptr.vmem [resolvable:$true] %s116
    %119 = dma.hbm_to_vmem [thread:$0]  %s106, 16, %s117, %s108
    %s120 = sadd.s32 %s20, 6
    %s121 = sld [smem:[#allocation5 + %s120]]
    %s122 = smul.addr %s121, 16
    %s123 = scalar_lea.hbm %s2, %s122
    %s124 = scalar_lea.vmem [#allocation2], 6
    %s125 = scalar_lea.sflag [#allocation3], 6
    // Predicated region
    $region30: #{tpu_custom_call.1} parent=1 // pred_check
      _
    $region31: #{tpu_custom_call.1} parent=1 // pred_check_branch
      %127 = sbr.rel target = $region33
    $region32: #{tpu_custom_call.1} parent=1 // pred_region
      %128 = sst [smem:[#allocation12]] [#allocation25]
      %129 = sst [smem:[#allocation13]] [#allocation24]
    $region33: #{tpu_custom_call.1} parent=1 // pred_fallthru
      _
    %131 = shalt.err (0)
    %s133 = sshll.u32 %s124, 4
    %s134 = int_to_ptr.vmem [resolvable:$true] %s133
    %136 = dma.hbm_to_vmem [thread:$0]  %s123, 16, %s134, %s125
    %s137 = sadd.s32 %s20, 7
    %s138 = sld [smem:[#allocation5 + %s137]]
    %s139 = smul.addr %s138, 16
    %s140 = scalar_lea.hbm %s2, %s139
    %s141 = scalar_lea.vmem [#allocation2], 7
    %s142 = scalar_lea.sflag [#allocation3], 7
    // Predicated region
    $region34: #{tpu_custom_call.1} parent=1 // pred_check
      _
    $region35: #{tpu_custom_call.1} parent=1 // pred_check_branch
      %144 = sbr.rel target = $region37
    $region36: #{tpu_custom_call.1} parent=1 // pred_region
      %145 = sst [smem:[#allocation12]] [#allocation27]
      %146 = sst [smem:[#allocation13]] [#allocation26]
    $region37: #{tpu_custom_call.1} parent=1 // pred_fallthru
      _
    %148 = shalt.err (0)
    %s150 = sshll.u32 %s141, 4
    %s151 = int_to_ptr.vmem [resolvable:$true] %s150
    %153 = dma.hbm_to_vmem [thread:$0]  %s140, 16, %s151, %s142
    %s154 = sadd.s32 %s20, 8
    %s155 = sld [smem:[#allocation5 + %s154]]
    %s156 = smul.addr %s155, 16
    %s157 = scalar_lea.hbm %s2, %s156
    %s158 = scalar_lea.vmem [#allocation2], 8
    %s159 = scalar_lea.sflag [#allocation3], 8
    // Predicated region
    $region38: #{tpu_custom_call.1} parent=1 // pred_check
      _
    $region39: #{tpu_custom_call.1} parent=1 // pred_check_branch
      %161 = sbr.rel target = $region41
    $region40: #{tpu_custom_call.1} parent=1 // pred_region
      %162 = sst [smem:[#allocation12]] [#allocation29]
      %163 = sst [smem:[#allocation13]] [#allocation28]
    $region41: #{tpu_custom_call.1} parent=1 // pred_fallthru
      _
    %165 = shalt.err (0)
    %s167 = sshll.u32 %s158, 4
    %s168 = int_to_ptr.vmem [resolvable:$true] %s167
    %170 = dma.hbm_to_vmem [thread:$0]  %s157, 16, %s168, %s159
    %s171 = sadd.s32 %s20, 9
    %s172 = sld [smem:[#allocation5 + %s171]]
    %s173 = smul.addr %s172, 16
    %s174 = scalar_lea.hbm %s2, %s173
    %s175 = scalar_lea.vmem [#allocation2], 9
    %s176 = scalar_lea.sflag [#allocation3], 9
    // Predicated region
    $region42: #{tpu_custom_call.1} parent=1 // pred_check
      _
    $region43: #{tpu_custom_call.1} parent=1 // pred_check_branch
      %178 = sbr.rel target = $region45
    $region44: #{tpu_custom_call.1} parent=1 // pred_region
      %179 = sst [smem:[#allocation12]] [#allocation31]
      %180 = sst [smem:[#allocation13]] [#allocation30]
    $region45: #{tpu_custom_call.1} parent=1 // pred_fallthru
      _
    %182 = shalt.err (0)
    %s184 = sshll.u32 %s175, 4
    %s185 = int_to_ptr.vmem [resolvable:$true] %s184
    %187 = dma.hbm_to_vmem [thread:$0]  %s174, 16, %s185, %s176
    %s188 = sadd.s32 %s20, 10
    %s189 = sld [smem:[#allocation5 + %s188]]
    %s190 = smul.addr %s189, 16
    %s191 = scalar_lea.hbm %s2, %s190
    %s192 = scalar_lea.vmem [#allocation2], 10
    %s193 = scalar_lea.sflag [#allocation3], 10
    // Predicated region
    $region46: #{tpu_custom_call.1} parent=1 // pred_check
      _
    $region47: #{tpu_custom_call.1} parent=1 // pred_check_branch
      %195 = sbr.rel target = $region49
    $region48: #{tpu_custom_call.1} parent=1 // pred_region
      %196 = sst [smem:[#allocation12]] [#allocation33]
      %197 = sst [smem:[#allocation13]] [#allocation32]
    $region49: #{tpu_custom_call.1} parent=1 // pred_fallthru
      _
    %199 = shalt.err (0)
    %s201 = sshll.u32 %s192, 4
    %s202 = int_to_ptr.vmem [resolvable:$true] %s201
    %204 = dma.hbm_to_vmem [thread:$0]  %s191, 16, %s202, %s193
    %s205 = sadd.s32 %s20, 11
    %s206 = sld [smem:[#allocation5 + %s205]]
    %s207 = smul.addr %s206, 16
    %s208 = scalar_lea.hbm %s2, %s207
    %s209 = scalar_lea.vmem [#allocation2], 11
    %s210 = scalar_lea.sflag [#allocation3], 11
    // Predicated region
    $region50: #{tpu_custom_call.1} parent=1 // pred_check
      _
    $region51: #{tpu_custom_call.1} parent=1 // pred_check_branch
      %212 = sbr.rel target = $region53
    $region52: #{tpu_custom_call.1} parent=1 // pred_region
      %213 = sst [smem:[#allocation12]] [#allocation35]
      %214 = sst [smem:[#allocation13]] [#allocation34]
    $region53: #{tpu_custom_call.1} parent=1 // pred_fallthru
      _
    %216 = shalt.err (0)
    %s218 = sshll.u32 %s209, 4
    %s219 = int_to_ptr.vmem [resolvable:$true] %s218
    %221 = dma.hbm_to_vmem [thread:$0]  %s208, 16, %s219, %s210
    %s222 = sadd.s32 %s20, 12
    %s223 = sld [smem:[#allocation5 + %s222]]
    %s224 = smul.addr %s223, 16
    %s225 = scalar_lea.hbm %s2, %s224
    %s226 = scalar_lea.vmem [#allocation2], 12
    %s227 = scalar_lea.sflag [#allocation3], 12
    // Predicated region
    $region54: #{tpu_custom_call.1} parent=1 // pred_check
      _
    $region55: #{tpu_custom_call.1} parent=1 // pred_check_branch
      %229 = sbr.rel target = $region57
    $region56: #{tpu_custom_call.1} parent=1 // pred_region
      %230 = sst [smem:[#allocation12]] [#allocation37]
      %231 = sst [smem:[#allocation13]] [#allocation36]
    $region57: #{tpu_custom_call.1} parent=1 // pred_fallthru
      _
    %233 = shalt.err (0)
    %s235 = sshll.u32 %s226, 4
    %s236 = int_to_ptr.vmem [resolvable:$true] %s235
    %238 = dma.hbm_to_vmem [thread:$0]  %s225, 16, %s236, %s227
    %s239 = sadd.s32 %s20, 13
    %s240 = sld [smem:[#allocation5 + %s239]]
    %s241 = smul.addr %s240, 16
    %s242 = scalar_lea.hbm %s2, %s241
    %s243 = scalar_lea.vmem [#allocation2], 13
    %s244 = scalar_lea.sflag [#allocation3], 13
    // Predicated region
    $region58: #{tpu_custom_call.1} parent=1 // pred_check
      _
    $region59: #{tpu_custom_call.1} parent=1 // pred_check_branch
      %246 = sbr.rel target = $region61
    $region60: #{tpu_custom_call.1} parent=1 // pred_region
      %247 = sst [smem:[#allocation12]] [#allocation39]
      %248 = sst [smem:[#allocation13]] [#allocation38]
    $region61: #{tpu_custom_call.1} parent=1 // pred_fallthru
      _
    %250 = shalt.err (0)
    %s252 = sshll.u32 %s243, 4
    %s253 = int_to_ptr.vmem [resolvable:$true] %s252
    %255 = dma.hbm_to_vmem [thread:$0]  %s242, 16, %s253, %s244
    %s256 = sadd.s32 %s20, 14
    %s257 = sld [smem:[#allocation5 + %s256]]
    %s258 = smul.addr %s257, 16
    %s259 = scalar_lea.hbm %s2, %s258
    %s260 = scalar_lea.vmem [#allocation2], 14
    %s261 = scalar_lea.sflag [#allocation3], 14
    // Predicated region
    $region62: #{tpu_custom_call.1} parent=1 // pred_check
      _
    $region63: #{tpu_custom_call.1} parent=1 // pred_check_branch
      %263 = sbr.rel target = $region65
    $region64: #{tpu_custom_call.1} parent=1 // pred_region
      %264 = sst [smem:[#allocation12]] [#allocation41]
      %265 = sst [smem:[#allocation13]] [#allocation40]
    $region65: #{tpu_custom_call.1} parent=1 // pred_fallthru
      _
    %267 = shalt.err (0)
    %s269 = sshll.u32 %s260, 4
    %s270 = int_to_ptr.vmem [resolvable:$true] %s269
    %272 = dma.hbm_to_vmem [thread:$0]  %s259, 16, %s270, %s261
    %s273 = sadd.s32 %s20, 15
    %s274 = sld [smem:[#allocation5 + %s273]]
    %s275 = smul.addr %s274, 16
    %s276 = scalar_lea.hbm %s2, %s275
    %s277 = scalar_lea.vmem [#allocation2], 15
    %s278 = scalar_lea.sflag [#allocation3], 15
    // Predicated region
    $region66: #{tpu_custom_call.1} parent=1 // pred_check
      _
    $region67: #{tpu_custom_call.1} parent=1 // pred_check_branch
      %280 = sbr.rel target = $region69
    $region68: #{tpu_custom_call.1} parent=1 // pred_region
      %281 = sst [smem:[#allocation12]] [#allocation43]
      %282 = sst [smem:[#allocation13]] [#allocation42]
    $region69: #{tpu_custom_call.1} parent=1 // pred_fallthru
      _
    %284 = shalt.err (0)
    %s286 = sshll.u32 %s277, 4
    %s287 = int_to_ptr.vmem [resolvable:$true] %s286
    %289 = dma.hbm_to_vmem [thread:$0]  %s276, 16, %s287, %s278
    %s290 = smul.u32 1, 1
    %s291 = sshll.u32 %s290, 4
    %292 = dma.done [#allocation3], %s291
    %s293 = sshll.u32 %s290, 4
    %294 = dma.done %s40, %s293
    %s295 = sshll.u32 %s290, 4
    %296 = dma.done %s57, %s295
    %s297 = sshll.u32 %s290, 4
    %298 = dma.done %s74, %s297
    %s299 = sshll.u32 %s290, 4
    %300 = dma.done %s91, %s299
    %s301 = sshll.u32 %s290, 4
    %302 = dma.done %s108, %s301
    %s303 = sshll.u32 %s290, 4
    %304 = dma.done %s125, %s303
    %s305 = sshll.u32 %s290, 4
    %306 = dma.done %s142, %s305
    %s307 = sshll.u32 %s290, 4
    %308 = dma.done %s159, %s307
    %s309 = sshll.u32 %s290, 4
    %310 = dma.done %s176, %s309
    %s311 = sshll.u32 %s290, 4
    %312 = dma.done %s193, %s311
    %s313 = sshll.u32 %s290, 4
    %314 = dma.done %s210, %s313
    %s315 = sshll.u32 %s290, 4
    %316 = dma.done %s227, %s315
    %s317 = sshll.u32 %s290, 4
    %318 = dma.done %s244, %s317
    %s319 = sshll.u32 %s290, 4
    %320 = dma.done %s261, %s319
    %s321 = sshll.u32 %s290, 4
    %322 = dma.done %s278, %s321
    %v323 = vld [vmem:[#allocation2] sm:$0xff]
    %v324 = vld [vmem:[#allocation2 + $0x8] sm:$0xff]
    %325 = vst [vmem:[#allocation6] sm:$0xff] %v323
    %326 = vst [vmem:[#allocation6 + $0x8] sm:$0xff] %v324
    %v327 = vld [vmem:[%s1] sm:$0xff]
    %v328 = vld [vmem:[%s1 + $0x8] sm:$0xff]
    %v329 = vlaneseq
    %v330 = vand.u32 %v329, 127
    %331 = vset.pattern.permute.xlu0 0
    %332 = vperm.xlu0 %331, %v327
    %v333 = vpop.permute.xlu0 %332
    %334 = vset.pattern.permute.xlu0 0
    %335 = vperm.xlu0 %334, %v328
    %v336 = vpop.permute.xlu0 %335
    %vm337 = vcmp.eq.s32.totalorder %v330, %v333
    %vm338 = vcmp.eq.s32.totalorder %v330, %v336
    %v339 = vsel %vm337, %v323, 0.0
    %v340 = vsel %vm338, %v324, 0.0
    %341 = vadd.xlane.f32.xlu0 %v339
    %v342 = vpop.xlane.xlu0 %341
    %343 = vadd.xlane.f32.xlu0 %v340
    %v344 = vpop.xlane.xlu0 %343
    %345 = vmax.xlane.f32.xlu0 %v323
    %v346 = vpop.xlane.xlu0 %345
    %347 = vmax.xlane.f32.xlu0 %v324
    %v348 = vpop.xlane.xlu0 %347
    %v349 = vsub.f32 %v323, %v346
    %v350 = vsub.f32 %v324, %v348
    %v351 = vmul.f32 %v349, 1.442695
    %v352 = vpow.pop %v351
    %v353 = vmul.f32 %v350, 1.442695
    %v354 = vpow.pop %v353
    %355 = vadd.xlane.f32.xlu0 %v352
    %v356 = vpop.xlane.xlu0 %355
    %357 = vadd.xlane.f32.xlu0 %v354
    %v358 = vpop.xlane.xlu0 %357
    %v359 = vlog2.pop %v356
    %v360 = vmul.f32 %v359, 0.6931472
    %v361 = vlog2.pop %v358
    %v362 = vmul.f32 %v361, 0.6931472
    %v363 = vadd.f32 %v346, %v360
    %v364 = vadd.f32 %v348, %v362
    %v365 = vsub.f32 %v363, %v342
    %v366 = vsub.f32 %v364, %v344
    %367 = vst [vmem:[#allocation8] sm:$0xff] %v365
    %368 = vst [vmem:[#allocation8 + $0x8] sm:$0xff] %v366
    // Predicated region
    $region70: #{tpu_custom_call.1} parent=1 // pred_check
      _
    $region71: #{tpu_custom_call.1} parent=1 // pred_check_branch
      %370 = sbr.rel (0) target = $region73
    $region72: #{tpu_custom_call.1} parent=1 // pred_region
      %s372 = ssub.s32 256, 256
      %373 = vsyncadd [#allocation7], %s372
      %s374 = sshll.u32 [#allocation6], 4
      %s375 = int_to_ptr.vmem [resolvable:$true] %s374
      %380 = dma.vmem_to_hbm [thread:$0]  %s375, 256, %s3, [#allocation7], 128, 128, 8
    $region73: #{tpu_custom_call.1} parent=1 // pred_fallthru
      _
    // Predicated region
    $region74: #{tpu_custom_call.1} parent=1 // pred_check
      _
    $region75: #{tpu_custom_call.1} parent=1 // pred_check_branch
      %382 = sbr.rel (0) target = $region77
    $region76: #{tpu_custom_call.1} parent=1 // pred_region
      %s384 = ssub.s32 256, 256
      %385 = vsyncadd [#allocation9], %s384
      %s386 = sshll.u32 [#allocation8], 4
      %s387 = int_to_ptr.vmem [resolvable:$true] %s386
      %392 = dma.vmem_to_hbm [thread:$0]  %s387, 256, %s4, [#allocation9], 128, 128, 8
    $region77: #{tpu_custom_call.1} parent=1 // pred_fallthru
      _
    // Predicated region
    $region78: #{tpu_custom_call.1} parent=1 // pred_check
      _
    $region79: #{tpu_custom_call.1} parent=1 // pred_check_branch
      %394 = sbr.rel (0) target = $region81
    $region80: #{tpu_custom_call.1} parent=1 // pred_region
      %395 = dma.done [#allocation7], 256
    $region81: #{tpu_custom_call.1} parent=1 // pred_fallthru
      _
    // Predicated region
    $region82: #{tpu_custom_call.1} parent=1 // pred_check
      _
    $region83: #{tpu_custom_call.1} parent=1 // pred_check_branch
      %397 = sbr.rel (0) target = $region85
    $region84: #{tpu_custom_call.1} parent=1 // pred_region
      %398 = dma.done [#allocation9], 256
    $region85: #{tpu_custom_call.1} parent=1 // pred_fallthru
      _
    %399 = vsyncpa [#allocation7], 1
    %400 = vsyncpa [#allocation9], 1
  %401 = vsyncmov [#allocation3]
  %s402 = vpop.sfrf %401
  %p403 = scmp.eq.s32.totalorder %s402, 0
  %p404 = pneg %p403
  %406 = shalt.err (%p404)
  %s407 = scalar_lea.sflag [#allocation3], 1
  %408 = vsyncmov %s407
  %s409 = vpop.sfrf %408
  %p410 = scmp.eq.s32.totalorder %s409, 0
  %p411 = pneg %p410
  %413 = shalt.err (%p411)
  %s414 = scalar_lea.sflag [#allocation3], 2
  %415 = vsyncmov %s414
  %s416 = vpop.sfrf %415
  %p417 = scmp.eq.s32.totalorder %s416, 0
  %p418 = pneg %p417
  %420 = shalt.err (%p418)
  %s421 = scalar_lea.sflag [#allocation3], 3
  %422 = vsyncmov %s421
  %s423 = vpop.sfrf %422
  %p424 = scmp.eq.s32.totalorder %s423, 0
  %p425 = pneg %p424
  %427 = shalt.err (%p425)
  %s428 = scalar_lea.sflag [#allocation3], 4
  %429 = vsyncmov %s428
  %s430 = vpop.sfrf %429
  %p431 = scmp.eq.s32.totalorder %s430, 0
  %p432 = pneg %p431
  %434 = shalt.err (%p432)
  %s435 = scalar_lea.sflag [#allocation3], 5
  %436 = vsyncmov %s435
  %s437 = vpop.sfrf %436
  %p438 = scmp.eq.s32.totalorder %s437, 0
  %p439 = pneg %p438
  %441 = shalt.err (%p439)
  %s442 = scalar_lea.sflag [#allocation3], 6
  %443 = vsyncmov %s442
  %s444 = vpop.sfrf %443
  %p445 = scmp.eq.s32.totalorder %s444, 0
  %p446 = pneg %p445
  %448 = shalt.err (%p446)
  %s449 = scalar_lea.sflag [#allocation3], 7
  %450 = vsyncmov %s449
  %s451 = vpop.sfrf %450
  %p452 = scmp.eq.s32.totalorder %s451, 0
  %p453 = pneg %p452
  %455 = shalt.err (%p453)
  %s456 = scalar_lea.sflag [#allocation3], 8
  %457 = vsyncmov %s456
  %s458 = vpop.sfrf %457
  %p459 = scmp.eq.s32.totalorder %s458, 0
  %p460 = pneg %p459
  %462 = shalt.err (%p460)
  %s463 = scalar_lea.sflag [#allocation3], 9
  %464 = vsyncmov %s463
  %s465 = vpop.sfrf %464
  %p466 = scmp.eq.s32.totalorder %s465, 0
  %p467 = pneg %p466
  %469 = shalt.err (%p467)
  %s470 = scalar_lea.sflag [#allocation3], 10
  %471 = vsyncmov %s470
  %s472 = vpop.sfrf %471
  %p473 = scmp.eq.s32.totalorder %s472, 0
  %p474 = pneg %p473
  %476 = shalt.err (%p474)
  %s477 = scalar_lea.sflag [#allocation3], 11
  %478 = vsyncmov %s477
  %s479 = vpop.sfrf %478
  %p480 = scmp.eq.s32.totalorder %s479, 0
  %p481 = pneg %p480
  %483 = shalt.err (%p481)
  %s484 = scalar_lea.sflag [#allocation3], 12
  %485 = vsyncmov %s484
  %s486 = vpop.sfrf %485
  %p487 = scmp.eq.s32.totalorder %s486, 0
  %p488 = pneg %p487
  %490 = shalt.err (%p488)
  %s491 = scalar_lea.sflag [#allocation3], 13
  %492 = vsyncmov %s491
  %s493 = vpop.sfrf %492
  %p494 = scmp.eq.s32.totalorder %s493, 0
  %p495 = pneg %p494
  %497 = shalt.err (%p495)
  %s498 = scalar_lea.sflag [#allocation3], 14
  %499 = vsyncmov %s498
  %s500 = vpop.sfrf %499
  %p501 = scmp.eq.s32.totalorder %s500, 0
  %p502 = pneg %p501
  %504 = shalt.err (%p502)
  %s505 = scalar_lea.sflag [#allocation3], 15
  %506 = vsyncmov %s505
  %s507 = vpop.sfrf %506
  %p508 = scmp.eq.s32.totalorder %s507, 0
  %p509 = pneg %p508
  %511 = shalt.err (%p509)

</llo_original>
